<compile_context>
chip_gen: v5e
topology: v5e:2x2
jax: 0.10.0
libtpu: 0.0.40
codegen_flags: <defaults>
</compile_context>

<pallas_src>
import jax
import jax.numpy as jnp
from jax.experimental import pallas as pl
from jax.experimental.pallas import tpu as pltpu


def conv1x1_kernel(x_ref, w_ref, b_ref, o_ref):
    # x_ref: (M, Cin) f32, w_ref: (Cin, Cout) bf16, b_ref: (1, Cout) f32,
    # o_ref: (M, Cout) f32.
    # Up-cast the bf16 weight in VMEM so x and the accumulation remain f32.
    w_f32 = w_ref[...].astype(jnp.float32)
    acc = jnp.dot(x_ref[...], w_f32, preferred_element_type=jnp.float32)
    o_ref[...] = (acc + b_ref[...]).astype(o_ref.dtype)


def conv2d_1x1(x_nchw, w_cin_cout_bf16, bias):
    """1x1 stride-1 Conv2d via a single-tile Pallas matmul kernel.

    x_nchw:          (N, Cin, H, W)  f32
    w_cin_cout_bf16: (Cin, Cout)     bf16 (transposed + quantized once at init)
    bias:            (Cout,)         f32
    returns          (N, Cout, H, W) f32
    """
    N, Cin, H, W = x_nchw.shape
    Cin_w, Cout = w_cin_cout_bf16.shape
    assert Cin_w == Cin
    M = N * H * W

    # Tiny layout glue (384 B activation, no weight movement).
    x2d = jnp.transpose(x_nchw, (0, 2, 3, 1)).reshape(M, Cin)   # (M, Cin) f32
    b2d = bias.reshape(1, Cout).astype(jnp.float32)             # (1, Cout) f32

    out_itemsize = jnp.dtype(x_nchw.dtype).itemsize
    bytes_accessed = (
        M * Cin * jnp.dtype(x2d.dtype).itemsize                     # x
        + Cin * Cout * jnp.dtype(w_cin_cout_bf16.dtype).itemsize    # weight (dominant)
        + Cout * jnp.dtype(b2d.dtype).itemsize                      # bias
        + M * Cout * out_itemsize                                   # output
    )
    cost = pl.CostEstimate(
        flops=2 * M * Cin * Cout,
        transcendentals=0,
        bytes_accessed=bytes_accessed,
    )

    vmem = pltpu.MemorySpace.VMEM
    out2d = pl.pallas_call(
        conv1x1_kernel,
        out_shape=jax.ShapeDtypeStruct((M, Cout), x_nchw.dtype),
        # No grid: the whole problem is one VMEM tile (single DMA per operand,
        # no double-buffering).  Output last dim 2304 = 18*128 -> lane-dense
        # unmasked stores.
        in_specs=[
            pl.BlockSpec(memory_space=vmem),   # x      (M, Cin)
            pl.BlockSpec(memory_space=vmem),   # weight (Cin, Cout) bf16
            pl.BlockSpec(memory_space=vmem),   # bias   (1, Cout)
        ],
        out_specs=pl.BlockSpec(memory_space=vmem),
        cost_estimate=cost,
    )(x2d, w_cin_cout_bf16, b2d)

    # Back to NCHW.
    return out2d.reshape(N, H, W, Cout).transpose(0, 3, 1, 2)


if __name__ == "__main__":
    # Module-implied shapes: Conv2d(96 -> 2304, k=1, s=1), input [1, 96, 1, 1].
    Cin, Cout = 96, 2304
    N, H, W = 1, 1, 1

    key = jax.random.PRNGKey(0)
    kx, kw, kb = jax.random.split(key, 3)

    x = jax.random.normal(kx, (N, Cin, H, W), dtype=jnp.float32)
    # Deterministic synthetic parameters (PyTorch-style uniform fan-in scaling).
    bound = 1.0 / (Cin ** 0.5)
    weight_oihw = jax.random.uniform(kw, (Cout, Cin, 1, 1), dtype=jnp.float32,
                                     minval=-bound, maxval=bound)
    bias = jax.random.uniform(kb, (Cout,), dtype=jnp.float32,
                              minval=-bound, maxval=bound)

    # --- one-time "module init": transpose to (Cin, Cout) and quantize to bf16 ---
    w_cin_cout = weight_oihw.reshape(Cout, Cin).T                  # (96, 2304) f32
    w_bf16 = jax.block_until_ready(w_cin_cout.astype(jnp.bfloat16))

    out = jax.block_until_ready(conv2d_1x1(x, w_bf16, bias))

    # References.
    x2d = jnp.transpose(x, (0, 2, 3, 1)).reshape(N * H * W, Cin)
    # (a) exact check vs. the same bf16-rounded weights -> verifies the kernel.
    ref_exact = (x2d @ w_bf16.astype(jnp.float32) + bias[None, :]).reshape(
        N, H, W, Cout).transpose(0, 3, 1, 2)
    # (b) loose check vs. the original f32 weights -> bounds quantization error.
    ref_f32 = (x2d @ w_cin_cout + bias[None, :]).reshape(
        N, H, W, Cout).transpose(0, 3, 1, 2)

    assert out.shape == (N, Cout, H, W), out.shape
    assert jnp.allclose(out, ref_exact, atol=1e-5, rtol=1e-5), \
        "kernel mismatch vs bf16-weight reference"
    assert jnp.allclose(out, ref_f32, atol=5e-2, rtol=5e-2), \
        "bf16 weight quantization error larger than expected"

    print("KERNEL_OK")
</pallas_src>

<mosaic_0001>
module attributes {stable_mosaic.version = 11 : i64} {
  func.func @conv1x1_kernel(%arg0: memref<1x96xf32, #tpu.memory_space<vmem>>, %arg1: memref<96x2304xbf16, #tpu.memory_space<vmem>>, %arg2: memref<1x2304xf32, #tpu.memory_space<vmem>>, %arg3: memref<1x2304xf32, #tpu.memory_space<vmem>>) attributes {dimension_semantics = [], scalar_prefetch = 0 : i64, scratch_operands = 0 : i64, tpu.core_type = #tpu.core_type<tc>} {
    %c0 = arith.constant 0 : index
    %c0_0 = arith.constant 0 : index
    %0 = vector.load %arg1[%c0, %c0_0] : memref<96x2304xbf16, #tpu.memory_space<vmem>>, vector<96x2304xbf16>
    %1 = arith.extf %0 : vector<96x2304xbf16> to vector<96x2304xf32>
    %c0_1 = arith.constant 0 : index
    %c0_2 = arith.constant 0 : index
    %2 = vector.load %arg0[%c0_1, %c0_2] : memref<1x96xf32, #tpu.memory_space<vmem>>, vector<1x96xf32>
    %cst = arith.constant dense<0.000000e+00> : vector<1x2304xf32>
    %3 = tpu.matmul %2, %1, %cst {dimension_numbers = #tpu.dot_dimension_numbers<[1], [0], [0], [1], [0, 0, 1, 1], [], []>} : vector<1x96xf32>, vector<96x2304xf32>, vector<1x2304xf32> -> vector<1x2304xf32>
    %c0_3 = arith.constant 0 : index
    %c0_4 = arith.constant 0 : index
    %4 = vector.load %arg2[%c0_3, %c0_4] : memref<1x2304xf32, #tpu.memory_space<vmem>>, vector<1x2304xf32>
    %5 = arith.addf %3, %4 : vector<1x2304xf32>
    %c0_5 = arith.constant 0 : index
    %c0_6 = arith.constant 0 : index
    %6 = vector.load %arg3[%c0_5, %c0_6] : memref<1x2304xf32, #tpu.memory_space<vmem>>, vector<1x2304xf32>
    tpu.vector_store %arg3[%c0_5, %c0_6], %5 {strides = array<i32>} : memref<1x2304xf32, #tpu.memory_space<vmem>>, vector<1x2304xf32>,
    return
  }
}

</mosaic_0001>

<llo_original>
// kernel: tpu_custom_call.1
$region0: #{tpu_custom_call.1}
  #allocation0 [shape = 'u32[]', space=smem, size = 0x4, offset = 0x4, fixed_abs, tag = 'smem constant byte address 0x4 - core index']
  #allocation1 [shape = 'u32[72,128]{1,0:T(1,128)}', space=vmem, size = 0x9000, scoped, tag = 'internal scratch']
  %s0 = inlined_call_operand.hbm [shape: f32[1,96], index: 0, kind: input, shape index: {}]
  %s1 = inlined_call_operand.hbm [shape: bf16[96,2304], index: 1, kind: input, shape index: {}]
  %s2 = inlined_call_operand.hbm [shape: f32[1,2304], index: 2, kind: input, shape index: {}]
  %s3 = inlined_call_operand.hbm [shape: f32[1,2304], index: 3, kind: output, shape index: {}]
  %s4 = sld [smem:[#allocation0]]
  $region34: #{tpu_custom_call.1} parent=0
    _
  %s6 = ssub.s32 1, %s4
  %s7 = scalar_select 0, %s6, %s4
  $region1: #{tpu_custom_call.1} parent=0
    #allocation2 [shape = 'u8[512]{0}', space=vmem, size = 0x400, scoped, tag = 'input window, operand 0, single buffered']
    #allocation3 [shape = 's32[1]{0}', space=sflag, size = 0x4, scoped, tag = 'scoped memory for tpu_custom_call.1']
    #allocation4 [shape = 's32[1]{0}', space=sflag, size = 0x4, scoped, tag = 'scoped memory for tpu_custom_call.1']
    #allocation5 [shape = 'u8[442368]{0}', space=vmem, size = 0x6c000, scoped, tag = 'input window, operand 1, single buffered']
    #allocation6 [shape = 's32[1]{0}', space=sflag, size = 0x4, scoped, tag = 'scoped memory for tpu_custom_call.1']
    #allocation7 [shape = 'u8[9216]{0}', space=vmem, size = 0x2400, scoped, tag = 'input window, operand 2, single buffered']
    #allocation8 [shape = 'u8[9216]{0}', space=vmem, size = 0x2400, scoped, tag = 'output window, operand 0, single buffered']
    %8 = vsyncpa [#allocation3], 0
    %9 = vsyncpa [#allocation6], 0
    %10 = vsyncpa [#allocation4], 0
    // Predicated region
    $region2: #{tpu_custom_call.1} parent=1 // pred_check
      _
    $region3: #{tpu_custom_call.1} parent=1 // pred_check_branch
      %12 = sbr.rel (0) target = $region5
    $region4: #{tpu_custom_call.1} parent=1 // pred_region
      %14 = vsyncadd [#allocation3], 0
      %s16 = sshll.u32 %s0, 4
      %s17 = int_to_ptr.hbm [resolvable:$true] %s16
      %s18 = sshll.u32 [#allocation2], 4
      %s19 = int_to_ptr.vmem [resolvable:$true] %s18
      %21 = dma.hbm_to_vmem [thread:$0]  %s17, 16, %s19, [#allocation3]
    $region5: #{tpu_custom_call.1} parent=1 // pred_fallthru
      _
    // Predicated region
    $region6: #{tpu_custom_call.1} parent=1 // pred_check
      _
    $region7: #{tpu_custom_call.1} parent=1 // pred_check_branch
      %23 = sbr.rel (0) target = $region9
    $region8: #{tpu_custom_call.1} parent=1 // pred_region
      %25 = vsyncadd [#allocation6], 0
      %s26 = sshll.u32 %s1, 4
      %s27 = int_to_ptr.hbm [resolvable:$true] %s26
      %s28 = sshll.u32 [#allocation5], 4
      %s29 = int_to_ptr.vmem [resolvable:$true] %s28
      %34 = dma.hbm_to_vmem [thread:$0]  %s27, 13824, %s29, [#allocation6], 1152, 1152, 72
    $region9: #{tpu_custom_call.1} parent=1 // pred_fallthru
      _
    // Predicated region
    $region10: #{tpu_custom_call.1} parent=1 // pred_check
      _
    $region11: #{tpu_custom_call.1} parent=1 // pred_check_branch
      %36 = sbr.rel (0) target = $region13
    $region12: #{tpu_custom_call.1} parent=1 // pred_region
      %38 = vsyncadd [#allocation6], 0
      %s40 = sshll.u32 %s2, 4
      %s41 = int_to_ptr.hbm [resolvable:$true] %s40
      %s42 = sshll.u32 [#allocation7], 4
      %s43 = int_to_ptr.vmem [resolvable:$true] %s42
      %45 = dma.hbm_to_vmem [thread:$0]  %s41, 288, %s43, [#allocation6]
    $region13: #{tpu_custom_call.1} parent=1 // pred_fallthru
      _
    // Predicated region
    $region14: #{tpu_custom_call.1} parent=1 // pred_check
      _
    $region15: #{tpu_custom_call.1} parent=1 // pred_check_branch
      %47 = sbr.rel (0) target = $region17
    $region16: #{tpu_custom_call.1} parent=1 // pred_region
      %49 = dma.done [#allocation3], 16
    $region17: #{tpu_custom_call.1} parent=1 // pred_fallthru
      _
    // Predicated region
    $region18: #{tpu_custom_call.1} parent=1 // pred_check
      _
    $region19: #{tpu_custom_call.1} parent=1 // pred_check_branch
      %51 = sbr.rel (0) target = $region21
    $region20: #{tpu_custom_call.1} parent=1 // pred_region
      %53 = dma.done [#allocation6], 13824
    $region21: #{tpu_custom_call.1} parent=1 // pred_fallthru
      _
    // Predicated region
    $region22: #{tpu_custom_call.1} parent=1 // pred_check
      _
    $region23: #{tpu_custom_call.1} parent=1 // pred_check_branch
      %55 = sbr.rel (0) target = $region25
    $region24: #{tpu_custom_call.1} parent=1 // pred_region
      %57 = dma.done [#allocation6], 288
    $region25: #{tpu_custom_call.1} parent=1 // pred_fallthru
      _
    %v58 = vld [vmem:[#allocation5] sm:$0xff]
    %v59 = vld [vmem:[#allocation5 + $0x8] sm:$0xff]
    %v60 = vld [vmem:[#allocation5 + $0x10] sm:$0xff]
    %v61 = vld [vmem:[#allocation5 + $0x18] sm:$0xff]
    %v62 = vld [vmem:[#allocation5 + $0x20] sm:$0xff]
    %v63 = vld [vmem:[#allocation5 + $0x28] sm:$0xff]
    %v64 = vld [vmem:[#allocation5 + $0x30] sm:$0xff]
    %v65 = vld [vmem:[#allocation5 + $0x38] sm:$0xff]
    %v66 = vld [vmem:[#allocation5 + $0x40] sm:$0xff]
    %v67 = vld [vmem:[#allocation5 + $0x48] sm:$0xff]
    %v68 = vld [vmem:[#allocation5 + $0x50] sm:$0xff]
    %v69 = vld [vmem:[#allocation5 + $0x58] sm:$0xff]
    %v70 = vld [vmem:[#allocation5 + $0x60] sm:$0xff]
    %v71 = vld [vmem:[#allocation5 + $0x68] sm:$0xff]
    %v72 = vld [vmem:[#allocation5 + $0x70] sm:$0xff]
    %v73 = vld [vmem:[#allocation5 + $0x78] sm:$0xff]
    %v74 = vld [vmem:[#allocation5 + $0x80] sm:$0xff]
    %v75 = vld [vmem:[#allocation5 + $0x88] sm:$0xff]
    %v76 = vld [vmem:[#allocation5 + $0x90] sm:$0xff]
    %v77 = vld [vmem:[#allocation5 + $0x98] sm:$0xff]
    %v78 = vld [vmem:[#allocation5 + $0xa0] sm:$0xff]
    %v79 = vld [vmem:[#allocation5 + $0xa8] sm:$0xff]
    %v80 = vld [vmem:[#allocation5 + $0xb0] sm:$0xff]
    %v81 = vld [vmem:[#allocation5 + $0xb8] sm:$0xff]
    %v82 = vld [vmem:[#allocation5 + $0xc0] sm:$0xff]
    %v83 = vld [vmem:[#allocation5 + $0xc8] sm:$0xff]
    %v84 = vld [vmem:[#allocation5 + $0xd0] sm:$0xff]
    %v85 = vld [vmem:[#allocation5 + $0xd8] sm:$0xff]
    %v86 = vld [vmem:[#allocation5 + $0xe0] sm:$0xff]
    %v87 = vld [vmem:[#allocation5 + $0xe8] sm:$0xff]
    %v88 = vld [vmem:[#allocation5 + $0xf0] sm:$0xff]
    %v89 = vld [vmem:[#allocation5 + $0xf8] sm:$0xff]
    %v90 = vld [vmem:[#allocation5 + $0x100] sm:$0xff]
    %v91 = vld [vmem:[#allocation5 + $0x108] sm:$0xff]
    %v92 = vld [vmem:[#allocation5 + $0x110] sm:$0xff]
    %v93 = vld [vmem:[#allocation5 + $0x118] sm:$0xff]
    %v94 = vld [vmem:[#allocation5 + $0x120] sm:$0xff]
    %v95 = vld [vmem:[#allocation5 + $0x128] sm:$0xff]
    %v96 = vld [vmem:[#allocation5 + $0x130] sm:$0xff]
    %v97 = vld [vmem:[#allocation5 + $0x138] sm:$0xff]
    %v98 = vld [vmem:[#allocation5 + $0x140] sm:$0xff]
    %v99 = vld [vmem:[#allocation5 + $0x148] sm:$0xff]
    %v100 = vld [vmem:[#allocation5 + $0x150] sm:$0xff]
    %v101 = vld [vmem:[#allocation5 + $0x158] sm:$0xff]
    %v102 = vld [vmem:[#allocation5 + $0x160] sm:$0xff]
    %v103 = vld [vmem:[#allocation5 + $0x168] sm:$0xff]
    %v104 = vld [vmem:[#allocation5 + $0x170] sm:$0xff]
    %v105 = vld [vmem:[#allocation5 + $0x178] sm:$0xff]
    %v106 = vld [vmem:[#allocation5 + $0x180] sm:$0xff]
    %v107 = vld [vmem:[#allocation5 + $0x188] sm:$0xff]
    %v108 = vld [vmem:[#allocation5 + $0x190] sm:$0xff]
    %v109 = vld [vmem:[#allocation5 + $0x198] sm:$0xff]
    %v110 = vld [vmem:[#allocation5 + $0x1a0] sm:$0xff]
    %v111 = vld [vmem:[#allocation5 + $0x1a8] sm:$0xff]
    %v112 = vld [vmem:[#allocation5 + $0x1b0] sm:$0xff]
    %v113 = vld [vmem:[#allocation5 + $0x1b8] sm:$0xff]
    %v114 = vld [vmem:[#allocation5 + $0x1c0] sm:$0xff]
    %v115 = vld [vmem:[#allocation5 + $0x1c8] sm:$0xff]
    %v116 = vld [vmem:[#allocation5 + $0x1d0] sm:$0xff]
    %v117 = vld [vmem:[#allocation5 + $0x1d8] sm:$0xff]
    %v118 = vld [vmem:[#allocation5 + $0x1e0] sm:$0xff]
    %v119 = vld [vmem:[#allocation5 + $0x1e8] sm:$0xff]
    %v120 = vld [vmem:[#allocation5 + $0x1f0] sm:$0xff]
    %v121 = vld [vmem:[#allocation5 + $0x1f8] sm:$0xff]
    %v122 = vld [vmem:[#allocation5 + $0x200] sm:$0xff]
    %v123 = vld [vmem:[#allocation5 + $0x208] sm:$0xff]
    %v124 = vld [vmem:[#allocation5 + $0x210] sm:$0xff]
    %v125 = vld [vmem:[#allocation5 + $0x218] sm:$0xff]
    %v126 = vld [vmem:[#allocation5 + $0x220] sm:$0xff]
    %v127 = vld [vmem:[#allocation5 + $0x228] sm:$0xff]
    %v128 = vld [vmem:[#allocation5 + $0x230] sm:$0xff]
    %v129 = vld [vmem:[#allocation5 + $0x238] sm:$0xff]
    %v130 = vld [vmem:[#allocation5 + $0x240] sm:$0xff]
    %v131 = vld [vmem:[#allocation5 + $0x248] sm:$0xff]
    %v132 = vld [vmem:[#allocation5 + $0x250] sm:$0xff]
    %v133 = vld [vmem:[#allocation5 + $0x258] sm:$0xff]
    %v134 = vld [vmem:[#allocation5 + $0x260] sm:$0xff]
    %v135 = vld [vmem:[#allocation5 + $0x268] sm:$0xff]
    %v136 = vld [vmem:[#allocation5 + $0x270] sm:$0xff]
    %v137 = vld [vmem:[#allocation5 + $0x278] sm:$0xff]
    %v138 = vld [vmem:[#allocation5 + $0x280] sm:$0xff]
    %v139 = vld [vmem:[#allocation5 + $0x288] sm:$0xff]
    %v140 = vld [vmem:[#allocation5 + $0x290] sm:$0xff]
    %v141 = vld [vmem:[#allocation5 + $0x298] sm:$0xff]
    %v142 = vld [vmem:[#allocation5 + $0x2a0] sm:$0xff]
    %v143 = vld [vmem:[#allocation5 + $0x2a8] sm:$0xff]
    %v144 = vld [vmem:[#allocation5 + $0x2b0] sm:$0xff]
    %v145 = vld [vmem:[#allocation5 + $0x2b8] sm:$0xff]
    %v146 = vld [vmem:[#allocation5 + $0x2c0] sm:$0xff]
    %v147 = vld [vmem:[#allocation5 + $0x2c8] sm:$0xff]
    %v148 = vld [vmem:[#allocation5 + $0x2d0] sm:$0xff]
    %v149 = vld [vmem:[#allocation5 + $0x2d8] sm:$0xff]
    %v150 = vld [vmem:[#allocation5 + $0x2e0] sm:$0xff]
    %v151 = vld [vmem:[#allocation5 + $0x2e8] sm:$0xff]
    %v152 = vld [vmem:[#allocation5 + $0x2f0] sm:$0xff]
    %v153 = vld [vmem:[#allocation5 + $0x2f8] sm:$0xff]
    %v154 = vld [vmem:[#allocation5 + $0x300] sm:$0xff]
    %v155 = vld [vmem:[#allocation5 + $0x308] sm:$0xff]
    %v156 = vld [vmem:[#allocation5 + $0x310] sm:$0xff]
    %v157 = vld [vmem:[#allocation5 + $0x318] sm:$0xff]
    %v158 = vld [vmem:[#allocation5 + $0x320] sm:$0xff]
    %v159 = vld [vmem:[#allocation5 + $0x328] sm:$0xff]
    %v160 = vld [vmem:[#allocation5 + $0x330] sm:$0xff]
    %v161 = vld [vmem:[#allocation5 + $0x338] sm:$0xff]
    %v162 = vld [vmem:[#allocation5 + $0x340] sm:$0xff]
    %v163 = vld [vmem:[#allocation5 + $0x348] sm:$0xff]
    %v164 = vld [vmem:[#allocation5 + $0x350] sm:$0xff]
    %v165 = vld [vmem:[#allocation5 + $0x358] sm:$0xff]
    %v166 = vunpack.c.l.bf16 %v58
    %v167 = vunpack.c.h.bf16 %v58
    %v168 = vunpack.c.l.bf16 %v59
    %v169 = vunpack.c.h.bf16 %v59
    %v170 = vunpack.c.l.bf16 %v60
    %v171 = vunpack.c.h.bf16 %v60
    %v172 = vunpack.c.l.bf16 %v61
    %v173 = vunpack.c.h.bf16 %v61
    %v174 = vunpack.c.l.bf16 %v62
    %v175 = vunpack.c.h.bf16 %v62
    %v176 = vunpack.c.l.bf16 %v63
    %v177 = vunpack.c.h.bf16 %v63
    %v178 = vunpack.c.l.bf16 %v64
    %v179 = vunpack.c.h.bf16 %v64
    %v180 = vunpack.c.l.bf16 %v65
    %v181 = vunpack.c.h.bf16 %v65
    %v182 = vunpack.c.l.bf16 %v66
    %v183 = vunpack.c.h.bf16 %v66
    %v184 = vunpack.c.l.bf16 %v67
    %v185 = vunpack.c.h.bf16 %v67
    %v186 = vunpack.c.l.bf16 %v68
    %v187 = vunpack.c.h.bf16 %v68
    %v188 = vunpack.c.l.bf16 %v69
    %v189 = vunpack.c.h.bf16 %v69
    %v190 = vunpack.c.l.bf16 %v70
    %v191 = vunpack.c.h.bf16 %v70
    %v192 = vunpack.c.l.bf16 %v71
    %v193 = vunpack.c.h.bf16 %v71
    %v194 = vunpack.c.l.bf16 %v72
    %v195 = vunpack.c.h.bf16 %v72
    %v196 = vunpack.c.l.bf16 %v73
    %v197 = vunpack.c.h.bf16 %v73
    %v198 = vunpack.c.l.bf16 %v74
    %v199 = vunpack.c.h.bf16 %v74
    %v200 = vunpack.c.l.bf16 %v75
    %v201 = vunpack.c.h.bf16 %v75
    %v202 = vunpack.c.l.bf16 %v76
    %v203 = vunpack.c.h.bf16 %v76
    %v204 = vunpack.c.l.bf16 %v77
    %v205 = vunpack.c.h.bf16 %v77
    %v206 = vunpack.c.l.bf16 %v78
    %v207 = vunpack.c.h.bf16 %v78
    %v208 = vunpack.c.l.bf16 %v79
    %v209 = vunpack.c.h.bf16 %v79
    %v210 = vunpack.c.l.bf16 %v80
    %v211 = vunpack.c.h.bf16 %v80
    %v212 = vunpack.c.l.bf16 %v81
    %v213 = vunpack.c.h.bf16 %v81
    %v214 = vunpack.c.l.bf16 %v82
    %v215 = vunpack.c.h.bf16 %v82
    %v216 = vunpack.c.l.bf16 %v83
    %v217 = vunpack.c.h.bf16 %v83
    %v218 = vunpack.c.l.bf16 %v84
    %v219 = vunpack.c.h.bf16 %v84
    %v220 = vunpack.c.l.bf16 %v85
    %v221 = vunpack.c.h.bf16 %v85
    %v222 = vunpack.c.l.bf16 %v86
    %v223 = vunpack.c.h.bf16 %v86
    %v224 = vunpack.c.l.bf16 %v87
    %v225 = vunpack.c.h.bf16 %v87
    %v226 = vunpack.c.l.bf16 %v88
    %v227 = vunpack.c.h.bf16 %v88
    %v228 = vunpack.c.l.bf16 %v89
    %v229 = vunpack.c.h.bf16 %v89
    %v230 = vunpack.c.l.bf16 %v90
    %v231 = vunpack.c.h.bf16 %v90
    %v232 = vunpack.c.l.bf16 %v91
    %v233 = vunpack.c.h.bf16 %v91
    %v234 = vunpack.c.l.bf16 %v92
    %v235 = vunpack.c.h.bf16 %v92
    %v236 = vunpack.c.l.bf16 %v93
    %v237 = vunpack.c.h.bf16 %v93
    %v238 = vunpack.c.l.bf16 %v94
    %v239 = vunpack.c.h.bf16 %v94
    %v240 = vunpack.c.l.bf16 %v95
    %v241 = vunpack.c.h.bf16 %v95
    %v242 = vunpack.c.l.bf16 %v96
    %v243 = vunpack.c.h.bf16 %v96
    %v244 = vunpack.c.l.bf16 %v97
    %v245 = vunpack.c.h.bf16 %v97
    %v246 = vunpack.c.l.bf16 %v98
    %v247 = vunpack.c.h.bf16 %v98
    %v248 = vunpack.c.l.bf16 %v99
    %v249 = vunpack.c.h.bf16 %v99
    %v250 = vunpack.c.l.bf16 %v100
    %v251 = vunpack.c.h.bf16 %v100
    %v252 = vunpack.c.l.bf16 %v101
    %v253 = vunpack.c.h.bf16 %v101
    %v254 = vunpack.c.l.bf16 %v102
    %v255 = vunpack.c.h.bf16 %v102
    %v256 = vunpack.c.l.bf16 %v103
    %v257 = vunpack.c.h.bf16 %v103
    %v258 = vunpack.c.l.bf16 %v104
    %v259 = vunpack.c.h.bf16 %v104
    %v260 = vunpack.c.l.bf16 %v105
    %v261 = vunpack.c.h.bf16 %v105
    %v262 = vunpack.c.l.bf16 %v106
    %v263 = vunpack.c.h.bf16 %v106
    %v264 = vunpack.c.l.bf16 %v107
    %v265 = vunpack.c.h.bf16 %v107
    %v266 = vunpack.c.l.bf16 %v108
    %v267 = vunpack.c.h.bf16 %v108
    %v268 = vunpack.c.l.bf16 %v109
    %v269 = vunpack.c.h.bf16 %v109
    %v270 = vunpack.c.l.bf16 %v110
    %v271 = vunpack.c.h.bf16 %v110
    %v272 = vunpack.c.l.bf16 %v111
    %v273 = vunpack.c.h.bf16 %v111
    %v274 = vunpack.c.l.bf16 %v112
    %v275 = vunpack.c.h.bf16 %v112
    %v276 = vunpack.c.l.bf16 %v113
    %v277 = vunpack.c.h.bf16 %v113
    %v278 = vunpack.c.l.bf16 %v114
    %v279 = vunpack.c.h.bf16 %v114
    %v280 = vunpack.c.l.bf16 %v115
    %v281 = vunpack.c.h.bf16 %v115
    %v282 = vunpack.c.l.bf16 %v116
    %v283 = vunpack.c.h.bf16 %v116
    %v284 = vunpack.c.l.bf16 %v117
    %v285 = vunpack.c.h.bf16 %v117
    %v286 = vunpack.c.l.bf16 %v118
    %v287 = vunpack.c.h.bf16 %v118
    %v288 = vunpack.c.l.bf16 %v119
    %v289 = vunpack.c.h.bf16 %v119
    %v290 = vunpack.c.l.bf16 %v120
    %v291 = vunpack.c.h.bf16 %v120
    %v292 = vunpack.c.l.bf16 %v121
    %v293 = vunpack.c.h.bf16 %v121
    %v294 = vunpack.c.l.bf16 %v122
    %v295 = vunpack.c.h.bf16 %v122
    %v296 = vunpack.c.l.bf16 %v123
    %v297 = vunpack.c.h.bf16 %v123
    %v298 = vunpack.c.l.bf16 %v124
    %v299 = vunpack.c.h.bf16 %v124
    %v300 = vunpack.c.l.bf16 %v125
    %v301 = vunpack.c.h.bf16 %v125
    %v302 = vunpack.c.l.bf16 %v126
    %v303 = vunpack.c.h.bf16 %v126
    %v304 = vunpack.c.l.bf16 %v127
    %v305 = vunpack.c.h.bf16 %v127
    %v306 = vunpack.c.l.bf16 %v128
    %v307 = vunpack.c.h.bf16 %v128
    %v308 = vunpack.c.l.bf16 %v129
    %v309 = vunpack.c.h.bf16 %v129
    %v310 = vunpack.c.l.bf16 %v130
    %v311 = vunpack.c.h.bf16 %v130
    %v312 = vunpack.c.l.bf16 %v131
    %v313 = vunpack.c.h.bf16 %v131
    %v314 = vunpack.c.l.bf16 %v132
    %v315 = vunpack.c.h.bf16 %v132
    %v316 = vunpack.c.l.bf16 %v133
    %v317 = vunpack.c.h.bf16 %v133
    %v318 = vunpack.c.l.bf16 %v134
    %v319 = vunpack.c.h.bf16 %v134
    %v320 = vunpack.c.l.bf16 %v135
    %v321 = vunpack.c.h.bf16 %v135
    %v322 = vunpack.c.l.bf16 %v136
    %v323 = vunpack.c.h.bf16 %v136
    %v324 = vunpack.c.l.bf16 %v137
    %v325 = vunpack.c.h.bf16 %v137
    %v326 = vunpack.c.l.bf16 %v138
    %v327 = vunpack.c.h.bf16 %v138
    %v328 = vunpack.c.l.bf16 %v139
    %v329 = vunpack.c.h.bf16 %v139
    %v330 = vunpack.c.l.bf16 %v140
    %v331 = vunpack.c.h.bf16 %v140
    %v332 = vunpack.c.l.bf16 %v141
    %v333 = vunpack.c.h.bf16 %v141
    %v334 = vunpack.c.l.bf16 %v142
    %v335 = vunpack.c.h.bf16 %v142
    %v336 = vunpack.c.l.bf16 %v143
    %v337 = vunpack.c.h.bf16 %v143
    %v338 = vunpack.c.l.bf16 %v144
    %v339 = vunpack.c.h.bf16 %v144
    %v340 = vunpack.c.l.bf16 %v145
    %v341 = vunpack.c.h.bf16 %v145
    %v342 = vunpack.c.l.bf16 %v146
    %v343 = vunpack.c.h.bf16 %v146
    %v344 = vunpack.c.l.bf16 %v147
    %v345 = vunpack.c.h.bf16 %v147
    %v346 = vunpack.c.l.bf16 %v148
    %v347 = vunpack.c.h.bf16 %v148
    %v348 = vunpack.c.l.bf16 %v149
    %v349 = vunpack.c.h.bf16 %v149
    %v350 = vunpack.c.l.bf16 %v150
    %v351 = vunpack.c.h.bf16 %v150
    %v352 = vunpack.c.l.bf16 %v151
    %v353 = vunpack.c.h.bf16 %v151
    %v354 = vunpack.c.l.bf16 %v152
    %v355 = vunpack.c.h.bf16 %v152
    %v356 = vunpack.c.l.bf16 %v153
    %v357 = vunpack.c.h.bf16 %v153
    %v358 = vunpack.c.l.bf16 %v154
    %v359 = vunpack.c.h.bf16 %v154
    %v360 = vunpack.c.l.bf16 %v155
    %v361 = vunpack.c.h.bf16 %v155
    %v362 = vunpack.c.l.bf16 %v156
    %v363 = vunpack.c.h.bf16 %v156
    %v364 = vunpack.c.l.bf16 %v157
    %v365 = vunpack.c.h.bf16 %v157
    %v366 = vunpack.c.l.bf16 %v158
    %v367 = vunpack.c.h.bf16 %v158
    %v368 = vunpack.c.l.bf16 %v159
    %v369 = vunpack.c.h.bf16 %v159
    %v370 = vunpack.c.l.bf16 %v160
    %v371 = vunpack.c.h.bf16 %v160
    %v372 = vunpack.c.l.bf16 %v161
    %v373 = vunpack.c.h.bf16 %v161
    %v374 = vunpack.c.l.bf16 %v162
    %v375 = vunpack.c.h.bf16 %v162
    %v376 = vunpack.c.l.bf16 %v163
    %v377 = vunpack.c.h.bf16 %v163
    %v378 = vunpack.c.l.bf16 %v164
    %v379 = vunpack.c.h.bf16 %v164
    %v380 = vunpack.c.l.bf16 %v165
    %v381 = vunpack.c.h.bf16 %v165
    %v382 = vld [vmem:[#allocation2] sm:$0x1]
    %v383 = vld [vmem:[#allocation7] sm:$0xff]
    %v384 = vld [vmem:[#allocation7 + $0x8] sm:$0xff]
    %v385 = vld [vmem:[#allocation7 + $0x10] sm:$0x3]
    %v389 = vperm.slane %v383, 0
    %v390 = vperm.slane %v383, 1
    %v391 = vperm.slane %v383, 2
    %v392 = vperm.slane %v383, 3
    %v393 = vperm.slane %v383, 4
    %v394 = vperm.slane %v383, 5
    %v395 = vperm.slane %v383, 6
    %v396 = vperm.slane %v383, 7
    %v397 = vperm.slane %v384, 0
    %v398 = vperm.slane %v384, 1
    %v399 = vperm.slane %v384, 2
    %v400 = vperm.slane %v384, 3
    %v401 = vperm.slane %v384, 4
    %v402 = vperm.slane %v384, 5
    %v403 = vperm.slane %v384, 6
    %v404 = vperm.slane %v384, 7
    %v405 = vperm.slane %v385, 0
    %v406 = vperm.slane %v385, 1
    %vm425 = vcmask 785408
    %v427 = vsel %vm425, %v382, 0
    %429 = vmatpush.msra.mxu0 0.0
    %430 = vmatpush.msra.mxu0 0.0
    %431 = vmatpush.msra.mxu0 0.0
    %432 = vmatpush.msra.mxu0 0.0
    %433 = vmatpush.msra.mxu0 %v364
    %434 = vmatpush.msra.mxu0 %v346
    %435 = vmatpush.msra.mxu0 %v328
    %436 = vmatpush.msra.mxu0 %v310
    %437 = vmatpush.msra.mxu0 %v292
    %438 = vmatpush.msra.mxu0 %v274
    %439 = vmatpush.msra.mxu0 %v256
    %440 = vmatpush.msra.mxu0 %v238
    %441 = vmatpush.msra.mxu0 %v220
    %442 = vmatpush.msra.mxu0 %v202
    %443 = vmatpush.msra.mxu0 %v184
    %444 = vmatpush.msra.mxu0 %v166
    %445 = vmatmul.f32.gmra.mxu0 %v427
    %v446 = vpop.f32.mrf.mxu0
    %v447 = vadd.f32 %v389, %v446
    %448 = vdwg.mxu0
    %449 = vmatpush.msra.mxu0 0.0
    %450 = vmatpush.msra.mxu0 0.0
    %451 = vmatpush.msra.mxu0 0.0
    %452 = vmatpush.msra.mxu0 0.0
    %453 = vmatpush.msra.mxu0 %v365
    %454 = vmatpush.msra.mxu0 %v347
    %455 = vmatpush.msra.mxu0 %v329
    %456 = vmatpush.msra.mxu0 %v311
    %457 = vmatpush.msra.mxu0 %v293
    %458 = vmatpush.msra.mxu0 %v275
    %459 = vmatpush.msra.mxu0 %v257
    %460 = vmatpush.msra.mxu0 %v239
    %461 = vmatpush.msra.mxu0 %v221
    %462 = vmatpush.msra.mxu0 %v203
    %463 = vmatpush.msra.mxu0 %v185
    %464 = vmatpush.msra.mxu0 %v167
    %465 = vmatmul.f32.gmra.mxu0 %v427
    %v466 = vpop.f32.mrf.mxu0
    %v467 = vadd.f32 %v390, %v466
    %468 = vdwg.mxu0
    %469 = vmatpush.msra.mxu0 0.0
    %470 = vmatpush.msra.mxu0 0.0
    %471 = vmatpush.msra.mxu0 0.0
    %472 = vmatpush.msra.mxu0 0.0
    %473 = vmatpush.msra.mxu0 %v366
    %474 = vmatpush.msra.mxu0 %v348
    %475 = vmatpush.msra.mxu0 %v330
    %476 = vmatpush.msra.mxu0 %v312
    %477 = vmatpush.msra.mxu0 %v294
    %478 = vmatpush.msra.mxu0 %v276
    %479 = vmatpush.msra.mxu0 %v258
    %480 = vmatpush.msra.mxu0 %v240
    %481 = vmatpush.msra.mxu0 %v222
    %482 = vmatpush.msra.mxu0 %v204
    %483 = vmatpush.msra.mxu0 %v186
    %484 = vmatpush.msra.mxu0 %v168
    %485 = vmatmul.f32.gmra.mxu0 %v427
    %v486 = vpop.f32.mrf.mxu0
    %v487 = vadd.f32 %v391, %v486
    %488 = vdwg.mxu0
    %489 = vmatpush.msra.mxu0 0.0
    %490 = vmatpush.msra.mxu0 0.0
    %491 = vmatpush.msra.mxu0 0.0
    %492 = vmatpush.msra.mxu0 0.0
    %493 = vmatpush.msra.mxu0 %v367
    %494 = vmatpush.msra.mxu0 %v349
    %495 = vmatpush.msra.mxu0 %v331
    %496 = vmatpush.msra.mxu0 %v313
    %497 = vmatpush.msra.mxu0 %v295
    %498 = vmatpush.msra.mxu0 %v277
    %499 = vmatpush.msra.mxu0 %v259
    %500 = vmatpush.msra.mxu0 %v241
    %501 = vmatpush.msra.mxu0 %v223
    %502 = vmatpush.msra.mxu0 %v205
    %503 = vmatpush.msra.mxu0 %v187
    %504 = vmatpush.msra.mxu0 %v169
    %505 = vmatmul.f32.gmra.mxu0 %v427
    %v506 = vpop.f32.mrf.mxu0
    %v507 = vadd.f32 %v392, %v506
    %508 = vdwg.mxu0
    %509 = vmatpush.msra.mxu0 0.0
    %510 = vmatpush.msra.mxu0 0.0
    %511 = vmatpush.msra.mxu0 0.0
    %512 = vmatpush.msra.mxu0 0.0
    %513 = vmatpush.msra.mxu0 %v368
    %514 = vmatpush.msra.mxu0 %v350
    %515 = vmatpush.msra.mxu0 %v332
    %516 = vmatpush.msra.mxu0 %v314
    %517 = vmatpush.msra.mxu0 %v296
    %518 = vmatpush.msra.mxu0 %v278
    %519 = vmatpush.msra.mxu0 %v260
    %520 = vmatpush.msra.mxu0 %v242
    %521 = vmatpush.msra.mxu0 %v224
    %522 = vmatpush.msra.mxu0 %v206
    %523 = vmatpush.msra.mxu0 %v188
    %524 = vmatpush.msra.mxu0 %v170
    %525 = vmatmul.f32.gmra.mxu0 %v427
    %v526 = vpop.f32.mrf.mxu0
    %v527 = vadd.f32 %v393, %v526
    %528 = vdwg.mxu0
    %529 = vmatpush.msra.mxu0 0.0
    %530 = vmatpush.msra.mxu0 0.0
    %531 = vmatpush.msra.mxu0 0.0
    %532 = vmatpush.msra.mxu0 0.0
    %533 = vmatpush.msra.mxu0 %v369
    %534 = vmatpush.msra.mxu0 %v351
    %535 = vmatpush.msra.mxu0 %v333
    %536 = vmatpush.msra.mxu0 %v315
    %537 = vmatpush.msra.mxu0 %v297
    %538 = vmatpush.msra.mxu0 %v279
    %539 = vmatpush.msra.mxu0 %v261
    %540 = vmatpush.msra.mxu0 %v243
    %541 = vmatpush.msra.mxu0 %v225
    %542 = vmatpush.msra.mxu0 %v207
    %543 = vmatpush.msra.mxu0 %v189
    %544 = vmatpush.msra.mxu0 %v171
    %545 = vmatmul.f32.gmra.mxu0 %v427
    %v546 = vpop.f32.mrf.mxu0
    %v547 = vadd.f32 %v394, %v546
    %548 = vdwg.mxu0
    %549 = vmatpush.msra.mxu0 0.0
    %550 = vmatpush.msra.mxu0 0.0
    %551 = vmatpush.msra.mxu0 0.0
    %552 = vmatpush.msra.mxu0 0.0
    %553 = vmatpush.msra.mxu0 %v370
    %554 = vmatpush.msra.mxu0 %v352
    %555 = vmatpush.msra.mxu0 %v334
    %556 = vmatpush.msra.mxu0 %v316
    %557 = vmatpush.msra.mxu0 %v298
    %558 = vmatpush.msra.mxu0 %v280
    %559 = vmatpush.msra.mxu0 %v262
    %560 = vmatpush.msra.mxu0 %v244
    %561 = vmatpush.msra.mxu0 %v226
    %562 = vmatpush.msra.mxu0 %v208
    %563 = vmatpush.msra.mxu0 %v190
    %564 = vmatpush.msra.mxu0 %v172
    %565 = vmatmul.f32.gmra.mxu0 %v427
    %v566 = vpop.f32.mrf.mxu0
    %v567 = vadd.f32 %v395, %v566
    %568 = vdwg.mxu0
    %569 = vmatpush.msra.mxu0 0.0
    %570 = vmatpush.msra.mxu0 0.0
    %571 = vmatpush.msra.mxu0 0.0
    %572 = vmatpush.msra.mxu0 0.0
    %573 = vmatpush.msra.mxu0 %v371
    %574 = vmatpush.msra.mxu0 %v353
    %575 = vmatpush.msra.mxu0 %v335
    %576 = vmatpush.msra.mxu0 %v317
    %577 = vmatpush.msra.mxu0 %v299
    %578 = vmatpush.msra.mxu0 %v281
    %579 = vmatpush.msra.mxu0 %v263
    %580 = vmatpush.msra.mxu0 %v245
    %581 = vmatpush.msra.mxu0 %v227
    %582 = vmatpush.msra.mxu0 %v209
    %583 = vmatpush.msra.mxu0 %v191
    %584 = vmatpush.msra.mxu0 %v173
    %585 = vmatmul.f32.gmra.mxu0 %v427
    %v586 = vpop.f32.mrf.mxu0
    %v587 = vadd.f32 %v396, %v586
    %588 = vdwg.mxu0
    %589 = vmatpush.msra.mxu0 0.0
    %590 = vmatpush.msra.mxu0 0.0
    %591 = vmatpush.msra.mxu0 0.0
    %592 = vmatpush.msra.mxu0 0.0
    %593 = vmatpush.msra.mxu0 %v372
    %594 = vmatpush.msra.mxu0 %v354
    %595 = vmatpush.msra.mxu0 %v336
    %596 = vmatpush.msra.mxu0 %v318
    %597 = vmatpush.msra.mxu0 %v300
    %598 = vmatpush.msra.mxu0 %v282
    %599 = vmatpush.msra.mxu0 %v264
    %600 = vmatpush.msra.mxu0 %v246
    %601 = vmatpush.msra.mxu0 %v228
    %602 = vmatpush.msra.mxu0 %v210
    %603 = vmatpush.msra.mxu0 %v192
    %604 = vmatpush.msra.mxu0 %v174
    %605 = vmatmul.f32.gmra.mxu0 %v427
    %v606 = vpop.f32.mrf.mxu0
    %v607 = vadd.f32 %v397, %v606
    %608 = vdwg.mxu0
    %609 = vmatpush.msra.mxu0 0.0
    %610 = vmatpush.msra.mxu0 0.0
    %611 = vmatpush.msra.mxu0 0.0
    %612 = vmatpush.msra.mxu0 0.0
    %613 = vmatpush.msra.mxu0 %v373
    %614 = vmatpush.msra.mxu0 %v355
    %615 = vmatpush.msra.mxu0 %v337
    %616 = vmatpush.msra.mxu0 %v319
    %617 = vmatpush.msra.mxu0 %v301
    %618 = vmatpush.msra.mxu0 %v283
    %619 = vmatpush.msra.mxu0 %v265
    %620 = vmatpush.msra.mxu0 %v247
    %621 = vmatpush.msra.mxu0 %v229
    %622 = vmatpush.msra.mxu0 %v211
    %623 = vmatpush.msra.mxu0 %v193
    %624 = vmatpush.msra.mxu0 %v175
    %625 = vmatmul.f32.gmra.mxu0 %v427
    %v626 = vpop.f32.mrf.mxu0
    %v627 = vadd.f32 %v398, %v626
    %628 = vdwg.mxu0
    %629 = vmatpush.msra.mxu0 0.0
    %630 = vmatpush.msra.mxu0 0.0
    %631 = vmatpush.msra.mxu0 0.0
    %632 = vmatpush.msra.mxu0 0.0
    %633 = vmatpush.msra.mxu0 %v374
    %634 = vmatpush.msra.mxu0 %v356
    %635 = vmatpush.msra.mxu0 %v338
    %636 = vmatpush.msra.mxu0 %v320
    %637 = vmatpush.msra.mxu0 %v302
    %638 = vmatpush.msra.mxu0 %v284
    %639 = vmatpush.msra.mxu0 %v266
    %640 = vmatpush.msra.mxu0 %v248
    %641 = vmatpush.msra.mxu0 %v230
    %642 = vmatpush.msra.mxu0 %v212
    %643 = vmatpush.msra.mxu0 %v194
    %644 = vmatpush.msra.mxu0 %v176
    %645 = vmatmul.f32.gmra.mxu0 %v427
    %v646 = vpop.f32.mrf.mxu0
    %v647 = vadd.f32 %v399, %v646
    %648 = vdwg.mxu0
    %649 = vmatpush.msra.mxu0 0.0
    %650 = vmatpush.msra.mxu0 0.0
    %651 = vmatpush.msra.mxu0 0.0
    %652 = vmatpush.msra.mxu0 0.0
    %653 = vmatpush.msra.mxu0 %v375
    %654 = vmatpush.msra.mxu0 %v357
    %655 = vmatpush.msra.mxu0 %v339
    %656 = vmatpush.msra.mxu0 %v321
    %657 = vmatpush.msra.mxu0 %v303
    %658 = vmatpush.msra.mxu0 %v285
    %659 = vmatpush.msra.mxu0 %v267
    %660 = vmatpush.msra.mxu0 %v249
    %661 = vmatpush.msra.mxu0 %v231
    %662 = vmatpush.msra.mxu0 %v213
    %663 = vmatpush.msra.mxu0 %v195
    %664 = vmatpush.msra.mxu0 %v177
    %665 = vmatmul.f32.gmra.mxu0 %v427
    %v666 = vpop.f32.mrf.mxu0
    %v667 = vadd.f32 %v400, %v666
    %668 = vdwg.mxu0
    %669 = vmatpush.msra.mxu0 0.0
    %670 = vmatpush.msra.mxu0 0.0
    %671 = vmatpush.msra.mxu0 0.0
    %672 = vmatpush.msra.mxu0 0.0
    %673 = vmatpush.msra.mxu0 %v376
    %674 = vmatpush.msra.mxu0 %v358
    %675 = vmatpush.msra.mxu0 %v340
    %676 = vmatpush.msra.mxu0 %v322
    %677 = vmatpush.msra.mxu0 %v304
    %678 = vmatpush.msra.mxu0 %v286
    %679 = vmatpush.msra.mxu0 %v268
    %680 = vmatpush.msra.mxu0 %v250
    %681 = vmatpush.msra.mxu0 %v232
    %682 = vmatpush.msra.mxu0 %v214
    %683 = vmatpush.msra.mxu0 %v196
    %684 = vmatpush.msra.mxu0 %v178
    %685 = vmatmul.f32.gmra.mxu0 %v427
    %v686 = vpop.f32.mrf.mxu0
    %v687 = vadd.f32 %v401, %v686
    %688 = vdwg.mxu0
    %689 = vmatpush.msra.mxu0 0.0
    %690 = vmatpush.msra.mxu0 0.0
    %691 = vmatpush.msra.mxu0 0.0
    %692 = vmatpush.msra.mxu0 0.0
    %693 = vmatpush.msra.mxu0 %v377
    %694 = vmatpush.msra.mxu0 %v359
    %695 = vmatpush.msra.mxu0 %v341
    %696 = vmatpush.msra.mxu0 %v323
    %697 = vmatpush.msra.mxu0 %v305
    %698 = vmatpush.msra.mxu0 %v287
    %699 = vmatpush.msra.mxu0 %v269
    %700 = vmatpush.msra.mxu0 %v251
    %701 = vmatpush.msra.mxu0 %v233
    %702 = vmatpush.msra.mxu0 %v215
    %703 = vmatpush.msra.mxu0 %v197
    %704 = vmatpush.msra.mxu0 %v179
    %705 = vmatmul.f32.gmra.mxu0 %v427
    %v706 = vpop.f32.mrf.mxu0
    %v707 = vadd.f32 %v402, %v706
    %708 = vdwg.mxu0
    %709 = vmatpush.msra.mxu0 0.0
    %710 = vmatpush.msra.mxu0 0.0
    %711 = vmatpush.msra.mxu0 0.0
    %712 = vmatpush.msra.mxu0 0.0
    %713 = vmatpush.msra.mxu0 %v378
    %714 = vmatpush.msra.mxu0 %v360
    %715 = vmatpush.msra.mxu0 %v342
    %716 = vmatpush.msra.mxu0 %v324
    %717 = vmatpush.msra.mxu0 %v306
    %718 = vmatpush.msra.mxu0 %v288
    %719 = vmatpush.msra.mxu0 %v270
    %720 = vmatpush.msra.mxu0 %v252
    %721 = vmatpush.msra.mxu0 %v234
    %722 = vmatpush.msra.mxu0 %v216
    %723 = vmatpush.msra.mxu0 %v198
    %724 = vmatpush.msra.mxu0 %v180
    %725 = vmatmul.f32.gmra.mxu0 %v427
    %v726 = vpop.f32.mrf.mxu0
    %v727 = vadd.f32 %v403, %v726
    %728 = vdwg.mxu0
    %729 = vmatpush.msra.mxu0 0.0
    %730 = vmatpush.msra.mxu0 0.0
    %731 = vmatpush.msra.mxu0 0.0
    %732 = vmatpush.msra.mxu0 0.0
    %733 = vmatpush.msra.mxu0 %v379
    %734 = vmatpush.msra.mxu0 %v361
    %735 = vmatpush.msra.mxu0 %v343
    %736 = vmatpush.msra.mxu0 %v325
    %737 = vmatpush.msra.mxu0 %v307
    %738 = vmatpush.msra.mxu0 %v289
    %739 = vmatpush.msra.mxu0 %v271
    %740 = vmatpush.msra.mxu0 %v253
    %741 = vmatpush.msra.mxu0 %v235
    %742 = vmatpush.msra.mxu0 %v217
    %743 = vmatpush.msra.mxu0 %v199
    %744 = vmatpush.msra.mxu0 %v181
    %745 = vmatmul.f32.gmra.mxu0 %v427
    %v746 = vpop.f32.mrf.mxu0
    %v747 = vadd.f32 %v404, %v746
    %748 = vdwg.mxu0
    %749 = vmatpush.msra.mxu0 0.0
    %750 = vmatpush.msra.mxu0 0.0
    %751 = vmatpush.msra.mxu0 0.0
    %752 = vmatpush.msra.mxu0 0.0
    %753 = vmatpush.msra.mxu0 %v380
    %754 = vmatpush.msra.mxu0 %v362
    %755 = vmatpush.msra.mxu0 %v344
    %756 = vmatpush.msra.mxu0 %v326
    %757 = vmatpush.msra.mxu0 %v308
    %758 = vmatpush.msra.mxu0 %v290
    %759 = vmatpush.msra.mxu0 %v272
    %760 = vmatpush.msra.mxu0 %v254
    %761 = vmatpush.msra.mxu0 %v236
    %762 = vmatpush.msra.mxu0 %v218
    %763 = vmatpush.msra.mxu0 %v200
    %764 = vmatpush.msra.mxu0 %v182
    %765 = vmatmul.f32.gmra.mxu0 %v427
    %v766 = vpop.f32.mrf.mxu0
    %v767 = vadd.f32 %v405, %v766
    %768 = vdwg.mxu0
    %769 = vmatpush.msra.mxu0 0.0
    %770 = vmatpush.msra.mxu0 0.0
    %771 = vmatpush.msra.mxu0 0.0
    %772 = vmatpush.msra.mxu0 0.0
    %773 = vmatpush.msra.mxu0 %v381
    %774 = vmatpush.msra.mxu0 %v363
    %775 = vmatpush.msra.mxu0 %v345
    %776 = vmatpush.msra.mxu0 %v327
    %777 = vmatpush.msra.mxu0 %v309
    %778 = vmatpush.msra.mxu0 %v291
    %779 = vmatpush.msra.mxu0 %v273
    %780 = vmatpush.msra.mxu0 %v255
    %781 = vmatpush.msra.mxu0 %v237
    %782 = vmatpush.msra.mxu0 %v219
    %783 = vmatpush.msra.mxu0 %v201
    %784 = vmatpush.msra.mxu0 %v183
    %785 = vmatmul.f32.gmra.mxu0 %v427
    %v786 = vpop.f32.mrf.mxu0
    %v787 = vadd.f32 %v406, %v786
    %788 = vdwg.mxu0
    %v807 = vrot.slane %v467, 7
    %v808 = vrot.slane %v487, 6
    %v809 = vrot.slane %v507, 5
    %v810 = vrot.slane %v527, 4
    %v811 = vrot.slane %v547, 3
    %v812 = vrot.slane %v567, 2
    %v813 = vrot.slane %v587, 1
    %v814 = vrot.slane %v627, 7
    %v815 = vrot.slane %v647, 6
    %v816 = vrot.slane %v667, 5
    %v817 = vrot.slane %v687, 4
    %v818 = vrot.slane %v707, 3
    %v819 = vrot.slane %v727, 2
    %v820 = vrot.slane %v747, 1
    %v821 = vrot.slane %v787, 7
    %vm822 = vcmask 1040384
    %v823 = vsel %vm822, %v447, %v807
    %vm824 = vcmask 1042434
    %v825 = vsel %vm824, %v808, %v809
    %vm826 = vcmask 1041408
    %v827 = vsel %vm826, %v823, %v825
    %vm828 = vcmask 1044484
    %v829 = vsel %vm828, %v810, %v811
    %vm830 = vcmask 1046534
    %v831 = vsel %vm830, %v812, %v813
    %vm832 = vcmask 1045508
    %v833 = vsel %vm832, %v829, %v831
    %vm834 = vcmask 1043456
    %v835 = vsel %vm834, %v827, %v833
    %v836 = vsel %vm822, %v607, %v814
    %v837 = vsel %vm824, %v815, %v816
    %v838 = vsel %vm826, %v836, %v837
    %v839 = vsel %vm828, %v817, %v818
    %v840 = vsel %vm830, %v819, %v820
    %v841 = vsel %vm832, %v839, %v840
    %v842 = vsel %vm834, %v838, %v841
    %v843 = vsel %vm822, %v767, %v821
    %847 = vst [vmem:[#allocation8] sm:$0xff] %v835
    %848 = vst [vmem:[#allocation8 + $0x8] sm:$0xff] %v842
    %v849 = vlaneseq
    %vm850 = vcmp.ge.s32.totalorder %v849, 0
    %vm851 = vcmp.lt.s32.totalorder %v849, 256
    %vm852 = vmand %vm850, %vm851
    %853 = vst.msk [vmem:[#allocation8 + $0x10] sm:$0x3] %vm852, %v843
    // Predicated region
    $region26: #{tpu_custom_call.1} parent=1 // pred_check
      _
    $region27: #{tpu_custom_call.1} parent=1 // pred_check_branch
      %855 = sbr.rel (0) target = $region29
    $region28: #{tpu_custom_call.1} parent=1 // pred_region
      %857 = vsyncadd [#allocation4], 0
      %s859 = sshll.u32 [#allocation8], 4
      %s860 = int_to_ptr.vmem [resolvable:$true] %s859
      %s861 = sshll.u32 %s3, 4
      %s862 = int_to_ptr.hbm [resolvable:$true] %s861
      %864 = dma.vmem_to_hbm [thread:$0]  %s860, 288, %s862, [#allocation4]
    $region29: #{tpu_custom_call.1} parent=1 // pred_fallthru
      _
    // Predicated region
    $region30: #{tpu_custom_call.1} parent=1 // pred_check
      _
    $region31: #{tpu_custom_call.1} parent=1 // pred_check_branch
      %866 = sbr.rel (0) target = $region33
    $region32: #{tpu_custom_call.1} parent=1 // pred_region
      %868 = dma.done [#allocation4], 288
    $region33: #{tpu_custom_call.1} parent=1 // pred_fallthru
      _
    %869 = vsyncpa [#allocation3], 1
    %870 = vsyncpa [#allocation6], 1
    %871 = vsyncpa [#allocation4], 1

</llo_original>
